<compile_context>
chip_gen: v7x
topology: tpu7x:2x2x1
jax: 0.10.0
libtpu: 0.0.40
codegen_flags: <defaults>
</compile_context>

<pallas_src>
import jax
import jax.numpy as jnp
from jax.experimental import pallas as pl
from jax.experimental.pallas import tpu as pltpu


def planar_kernel(x_ref, w_ref, s_ref, b_ref, f_ref, ld_ref):
    # x tile: (TN, D); w/s: (1, D); b: (1,) scalar in SMEM.
    x = x_ref[...].astype(jnp.float32)
    w = w_ref[...].astype(jnp.float32)
    s = s_ref[...].astype(jnp.float32)
    b = b_ref[0]

    # pre-activation: per-row lane reduction (stays on VPU/XLU, not MXU).
    pre = jnp.sum(x * w, axis=-1, keepdims=True) + b        # (TN, 1)
    act = jnp.tanh(pre)                                     # (TN, 1)  (EUP)

    # f = x + scale * activation   (broadcast (1,D) * (TN,1) -> (TN,D))
    f_ref[...] = (x + s * act).astype(f_ref.dtype)

    # det_grad = 1 + (1 - act^2) * sum(w * scale)
    w_dot_s = jnp.sum(w * s, axis=-1, keepdims=True)        # (1, 1)
    det_grad = 1.0 + (1.0 - act * act) * w_dot_s            # (TN, 1)

    # safe_log(|det_grad|), always f32.
    ld_ref[...] = jnp.log(jnp.abs(det_grad) + 1e-07)


def _choose_tile_rows(n, d, itemsize, vmem_budget_bytes=8 * 1024 * 1024):
    # Double-buffered x-in + f-out tiles dominate VMEM: ~ 4 * TN * D * itemsize.
    max_rows = vmem_budget_bytes // max(1, 4 * d * itemsize)
    tn = int(min(2048, max(8, max_rows)))
    tn -= tn % 8
    tn = max(tn, 8)
    n_pad8 = ((n + 7) // 8) * 8
    return min(tn, n_pad8)


def planar_forward(x, weight, bias, scale, *, tile_rows=None):
    N, D = x.shape
    itemsize = jnp.dtype(x.dtype).itemsize
    tn = tile_rows if tile_rows is not None else _choose_tile_rows(N, D, itemsize)
    assert tn % 8 == 0, "tile_rows must be a multiple of 8"

    n_pad = ((N + tn - 1) // tn) * tn
    x_in = x if n_pad == N else jnp.pad(x, ((0, n_pad - N), (0, 0)))
    grid = (n_pad // tn,)

    f, ld = pl.pallas_call(
        planar_kernel,
        grid=grid,
        out_shape=(
            jax.ShapeDtypeStruct((n_pad, D), x.dtype),
            jax.ShapeDtypeStruct((n_pad, 1), jnp.float32),
        ),
        in_specs=[
            pl.BlockSpec((tn, D), lambda i: (i, 0)),                 # x tile
            pl.BlockSpec((1, D), lambda i: (0, 0)),                  # weight (resident)
            pl.BlockSpec((1, D), lambda i: (0, 0)),                  # scale  (resident)
            pl.BlockSpec(memory_space=pltpu.MemorySpace.SMEM),       # bias scalar
        ],
        out_specs=(
            pl.BlockSpec((tn, D), lambda i: (i, 0)),                 # f tile
            pl.BlockSpec((tn, 1), lambda i: (i, 0)),                 # log-det tile
        ),
        compiler_params=pltpu.CompilerParams(
            dimension_semantics=("parallel",),
            vmem_limit_bytes=32 * 1024 * 1024,
        ),
    )(x_in, weight, scale, bias)

    if n_pad != N:
        f = f[:N]
        ld = ld[:N]
    return f, ld.squeeze(-1)


def planar_reference(x, weight, bias, scale):
    activation = jnp.tanh(x @ weight.T + bias)
    f = x + scale * activation
    psi = (1.0 - activation ** 2) * weight
    det_grad = 1.0 + psi @ scale.T
    ld = jnp.log(jnp.abs(det_grad) + 1e-07).squeeze(-1)
    return f, ld


if __name__ == "__main__":
    key = jax.random.PRNGKey(0)
    k_x, k_w, k_s, k_b, k_x2 = jax.random.split(key, 5)

    batch, dim = 8, 32

    x = jax.random.normal(k_x, (batch, dim), dtype=jnp.float32)
    weight = jax.random.uniform(k_w, (1, dim), jnp.float32, -0.01, 0.01)
    scale = jax.random.uniform(k_s, (1, dim), jnp.float32, -0.01, 0.01)
    bias = jax.random.uniform(k_b, (1,), jnp.float32, -0.01, 0.01)

    f, ld = planar_forward(x, weight, bias, scale)
    jax.block_until_ready((f, ld))

    f_ref, ld_ref = planar_reference(x, weight, bias, scale)
    assert f.shape == (batch, dim) and ld.shape == (batch,)
    assert jnp.allclose(f, f_ref, atol=1e-5, rtol=1e-5)
    assert jnp.allclose(ld, ld_ref, atol=1e-5, rtol=1e-5)

    # Exercise the multi-step pipelined grid + batch-padding path.
    batch2 = 1000
    x2 = jax.random.normal(k_x2, (batch2, dim), dtype=jnp.float32)
    f2, ld2 = planar_forward(x2, weight, bias, scale, tile_rows=128)
    jax.block_until_ready((f2, ld2))

    f2_ref, ld2_ref = planar_reference(x2, weight, bias, scale)
    assert f2.shape == (batch2, dim) and ld2.shape == (batch2,)
    assert jnp.allclose(f2, f2_ref, atol=1e-5, rtol=1e-5)
    assert jnp.allclose(ld2, ld2_ref, atol=1e-5, rtol=1e-5)

    print("KERNEL_OK")
</pallas_src>

<mosaic_0001>
module attributes {stable_mosaic.version = 11 : i64} {
  func.func @planar_kernel(%arg0: i32, %arg1: memref<8x32xf32, #tpu.memory_space<vmem>>, %arg2: memref<1x32xf32, #tpu.memory_space<vmem>>, %arg3: memref<1x32xf32, #tpu.memory_space<vmem>>, %arg4: memref<1xf32, #tpu.memory_space<smem>>, %arg5: memref<8x32xf32, #tpu.memory_space<vmem>>, %arg6: memref<8x1xf32, #tpu.memory_space<vmem>>) attributes {dimension_semantics = [#tpu.dimension_semantics<parallel>], iteration_bounds = array<i64: 1>, scalar_prefetch = 0 : i64, scratch_operands = 0 : i64, tpu.core_type = #tpu.core_type<tc>, window_params = [{transform_indices = @transform_0, window_bounds = array<i64: 8, 32>}, {pipeline_mode = #tpu.pipeline_mode<synchronous>, transform_indices = @transform_1, window_bounds = array<i64: 1, 32>}, {pipeline_mode = #tpu.pipeline_mode<synchronous>, transform_indices = @transform_2, window_bounds = array<i64: 1, 32>}, {transform_indices = @transform_3, window_bounds = array<i64: 1>}, {transform_indices = @transform_4, window_bounds = array<i64: 8, 32>}, {transform_indices = @transform_5, window_bounds = array<i64: 8, 1>}]} {
    %c0 = arith.constant 0 : index
    %c0_0 = arith.constant 0 : index
    %0 = vector.load %arg1[%c0, %c0_0] : memref<8x32xf32, #tpu.memory_space<vmem>>, vector<8x32xf32>
    %c0_1 = arith.constant 0 : index
    %c0_2 = arith.constant 0 : index
    %1 = vector.load %arg2[%c0_1, %c0_2] : memref<1x32xf32, #tpu.memory_space<vmem>>, vector<1x32xf32>
    %c0_3 = arith.constant 0 : index
    %c0_4 = arith.constant 0 : index
    %2 = vector.load %arg3[%c0_3, %c0_4] : memref<1x32xf32, #tpu.memory_space<vmem>>, vector<1x32xf32>
    %c0_5 = arith.constant 0 : index
    %3 = memref.load %arg4[%c0_5] : memref<1xf32, #tpu.memory_space<smem>>
    %4 = vector.broadcast %1 : vector<1x32xf32> to vector<8x32xf32>
    %5 = arith.mulf %0, %4 : vector<8x32xf32>
    %cst = arith.constant dense<0.000000e+00> : vector<8xf32>
    %6 = vector.multi_reduction <add>, %5, %cst [1] : vector<8x32xf32> to vector<8xf32>
    %7 = vector.shape_cast %6 : vector<8xf32> to vector<8x1xf32>
    %8 = vector.broadcast %3 : f32 to vector<8x1xf32>
    %9 = arith.addf %7, %8 : vector<8x1xf32>
    %10 = math.tanh %9 : vector<8x1xf32>
    %11 = vector.broadcast %2 : vector<1x32xf32> to vector<8x32xf32>
    %12 = vector.broadcast %10 : vector<8x1xf32> to vector<8x32xf32>
    %13 = arith.mulf %11, %12 : vector<8x32xf32>
    %14 = arith.addf %0, %13 : vector<8x32xf32>
    %c0_6 = arith.constant 0 : index
    %c0_7 = arith.constant 0 : index
    %15 = vector.load %arg5[%c0_6, %c0_7] : memref<8x32xf32, #tpu.memory_space<vmem>>, vector<8x32xf32>
    tpu.vector_store %arg5[%c0_6, %c0_7], %14 {strides = array<i32>} : memref<8x32xf32, #tpu.memory_space<vmem>>, vector<8x32xf32>,
    %16 = arith.mulf %1, %2 : vector<1x32xf32>
    %cst_8 = arith.constant dense<0.000000e+00> : vector<1xf32>
    %17 = vector.multi_reduction <add>, %16, %cst_8 [1] : vector<1x32xf32> to vector<1xf32>
    %18 = vector.shape_cast %17 : vector<1xf32> to vector<1x1xf32>
    %19 = arith.mulf %10, %10 : vector<8x1xf32>
    %cst_9 = arith.constant 1.000000e+00 : f32
    %20 = vector.broadcast %cst_9 : f32 to vector<8x1xf32>
    %21 = arith.subf %20, %19 : vector<8x1xf32>
    %22 = vector.broadcast %18 : vector<1x1xf32> to vector<8x1xf32>
    %23 = arith.mulf %21, %22 : vector<8x1xf32>
    %cst_10 = arith.constant 1.000000e+00 : f32
    %24 = vector.broadcast %cst_10 : f32 to vector<8x1xf32>
    %25 = arith.addf %24, %23 : vector<8x1xf32>
    %26 = math.absf %25 : vector<8x1xf32>
    %cst_11 = arith.constant 1.000000e-07 : f32
    %27 = vector.broadcast %cst_11 : f32 to vector<8x1xf32>
    %28 = arith.addf %26, %27 : vector<8x1xf32>
    %29 = math.log %28 : vector<8x1xf32>
    %c0_12 = arith.constant 0 : index
    %c0_13 = arith.constant 0 : index
    %30 = vector.load %arg6[%c0_12, %c0_13] : memref<8x1xf32, #tpu.memory_space<vmem>>, vector<8x1xf32>
    tpu.vector_store %arg6[%c0_12, %c0_13], %29 {strides = array<i32>} : memref<8x1xf32, #tpu.memory_space<vmem>>, vector<8x1xf32>,
    return
  }
  func.func @transform_0(%arg0: i32) -> (i32, i32) {
    %c0_i32 = arith.constant 0 : i32
    %c0_i32_0 = arith.constant 0 : i32
    return %arg0, %c0_i32 : i32, i32
  }
  func.func @transform_1(%arg0: i32) -> (i32, i32) {
    %c0_i32 = arith.constant 0 : i32
    %c0_i32_0 = arith.constant 0 : i32
    %c0_i32_1 = arith.constant 0 : i32
    return %c0_i32, %c0_i32_0 : i32, i32
  }
  func.func @transform_2(%arg0: i32) -> (i32, i32) {
    %c0_i32 = arith.constant 0 : i32
    %c0_i32_0 = arith.constant 0 : i32
    %c0_i32_1 = arith.constant 0 : i32
    return %c0_i32, %c0_i32_0 : i32, i32
  }
  func.func @transform_3(%arg0: i32) -> i32 {
    %c0_i32 = arith.constant 0 : i32
    %c0_i32_0 = arith.constant 0 : i32
    return %c0_i32 : i32
  }
  func.func @transform_4(%arg0: i32) -> (i32, i32) {
    %c0_i32 = arith.constant 0 : i32
    %c0_i32_0 = arith.constant 0 : i32
    return %arg0, %c0_i32 : i32, i32
  }
  func.func @transform_5(%arg0: i32) -> (i32, i32) {
    %c0_i32 = arith.constant 0 : i32
    %c0_i32_0 = arith.constant 0 : i32
    return %arg0, %c0_i32 : i32, i32
  }
}

</mosaic_0001>

<llo_original>
// kernel: tpu_custom_call.1
$region0: #{tpu_custom_call.1}
  #allocation0 [shape = 'u32[]', space=smem, size = 0x4, offset = 0x4, fixed_abs, tag = 'smem constant byte address 0x4 - core index']
  #allocation1 [shape = 'u32[144,128]{1,0:T(1,128)}', space=vmem, size = 0x12000, scoped, tag = 'internal scratch']
  #allocation2 [shape = 'f32[1]{0:T(128)S(6)}', space=smem, size = 0x200, scoped, tag = 'scoped memory for tpu_custom_call.1']
  %s0 = inlined_call_operand.hbm [shape: f32[8,32], index: 0, kind: input, shape index: {}]
  %s1 = inlined_call_operand.vmem [shape: f32[1,32], index: 1, kind: input, shape index: {}]
  %s2 = inlined_call_operand.vmem [shape: f32[1,32], index: 2, kind: input, shape index: {}]
  %s3 = inlined_call_operand.<no memory space> [shape: f32[1], index: 3, kind: input, shape index: {}]
  %s4 = inlined_call_operand.hbm [shape: f32[8,32], index: 4, kind: output, shape index: {0}]
  %s5 = inlined_call_operand.vmem [shape: f32[8,1], index: 5, kind: output, shape index: {1}]
  %6 = xla_tuple %s4, %s5
  %s7 = sld [smem:[#allocation0]]
  $region38: #{tpu_custom_call.1} parent=0
    _
  %s9 = ssub.s32 1, %s7
  %s10 = scalar_select 0, %s9, %s7
  %11 = sst [smem:[#allocation2]] %s3
  $region1: #{tpu_custom_call.1} parent=0
    #allocation3 [shape = 'u8[4096]{0}', space=vmem, size = 0x1000, scoped, tag = 'input window, operand 0, single buffered']
    #allocation4 [shape = 's32[1]{0}', space=sflag, size = 0x4, scoped, tag = 'scoped memory for tpu_custom_call.1']
    #allocation5 [shape = 's32[1]{0}', space=sflag, size = 0x4, scoped, tag = 'scoped memory for tpu_custom_call.1']
    #allocation6 [shape = 'u8[4096]{0}', space=vmem, size = 0x1000, scoped, tag = 'output window, operand 0, single buffered']
    %12 = vsyncpa [#allocation4], 0
    %13 = vsyncpa [#allocation5], 0
    // Predicated region
    $region2: #{tpu_custom_call.1} parent=1 // pred_check
      _
    $region3: #{tpu_custom_call.1} parent=1 // pred_check_branch
      %15 = sbr.rel (0) target = $region5
    $region4: #{tpu_custom_call.1} parent=1 // pred_region
      %s17 = ssub.s32 128, 128
      %18 = vsyncadd [#allocation4], %s17
      %s20 = sshll.u32 [#allocation3], 4
      %s21 = int_to_ptr.vmem [resolvable:$true] %s20
      %23 = dma.hbm_to_vmem [thread:$0]  %s0, 128, %s21, [#allocation4]
    $region5: #{tpu_custom_call.1} parent=1 // pred_fallthru
      _
    // Predicated region
    $region6: #{tpu_custom_call.1} parent=1 // pred_check
      _
    $region7: #{tpu_custom_call.1} parent=1 // pred_check_branch
      %25 = sbr.rel (0) target = $region9
    $region8: #{tpu_custom_call.1} parent=1 // pred_region
      _
    $region9: #{tpu_custom_call.1} parent=1 // pred_fallthru
      _
    // Predicated region
    $region10: #{tpu_custom_call.1} parent=1 // pred_check
      _
    $region11: #{tpu_custom_call.1} parent=1 // pred_check_branch
      %27 = sbr.rel (0) target = $region13
    $region12: #{tpu_custom_call.1} parent=1 // pred_region
      _
    $region13: #{tpu_custom_call.1} parent=1 // pred_fallthru
      _
    // Predicated region
    $region14: #{tpu_custom_call.1} parent=1 // pred_check
      _
    $region15: #{tpu_custom_call.1} parent=1 // pred_check_branch
      %29 = sbr.rel (0) target = $region17
    $region16: #{tpu_custom_call.1} parent=1 // pred_region
      _
    $region17: #{tpu_custom_call.1} parent=1 // pred_fallthru
      _
    // Predicated region
    $region18: #{tpu_custom_call.1} parent=1 // pred_check
      _
    $region19: #{tpu_custom_call.1} parent=1 // pred_check_branch
      %31 = sbr.rel (0) target = $region21
    $region20: #{tpu_custom_call.1} parent=1 // pred_region
      %32 = dma.done [#allocation4], 128
    $region21: #{tpu_custom_call.1} parent=1 // pred_fallthru
      _
    %v33 = vld [vmem:[#allocation3] sm:$0xff]
    %v34 = vld [vmem:[%s1] sm:$0x1]
    %v35 = vld [vmem:[%s2] sm:$0x1]
    %s36 = sld [smem:[#allocation2]]
    %v38 = vlaneseq
    %v39 = vshrl.u32 %v38, 7
    %v40 = vsub.s32 0, %v39
    %v41 = vrot.slane %v34, %v40
    %v43 = vmul.f32 %v33, %v41
    %vm44 = vcmask 261120
    %v45 = vsel %vm44, %v43, 0.0
    %46 = vadd.xlane.f32.xlu0 %v45
    %v47 = vpop.xlane.xlu0 %46
    %v48 = vstv %s36
    %v49 = vadd.f32 %v47, %v48
    %v50 = vtanh.pop %v49
    %v52 = vlaneseq
    %v53 = vshrl.u32 %v52, 7
    %v54 = vsub.s32 0, %v53
    %v55 = vrot.slane %v35, %v54
    %v57 = vmul.f32 %v55, %v50
    %v58 = vadd.f32 %v33, %v57
    %59 = vst.msk [vmem:[#allocation6] sm:$0xff] %vm44, %v58
    %v60 = vmul.f32 %v34, %v35
    %vm61 = vcmask 253952
    %v62 = vsel %vm61, %v60, 0.0
    %63 = vadd.xlane.f32.xlu0 %v62
    %v64 = vpop.xlane.xlu0 %63
    %v65 = vmul.f32 %v50, %v50
    %v66 = vsub.f32 1.0, %v65
    %v67 = vlaneseq
    %v68 = vshrl.u32 %v67, 7
    %v69 = vsub.s32 0, %v68
    %v70 = vrot.slane %v64, %v69
    %v71 = vmul.f32 %v66, %v70
    %v72 = vadd.f32 %v71, 1.0
    %v73 = vand.u32 2147483647, %v72
    %v74 = vadd.f32 %v73, 1e-07
    %v75 = vlog2.pop %v74
    %v76 = vmul.f32 %v75, 0.6931472
    %vm77 = vcmask 7168
    %78 = vst.msk [vmem:[%s5] sm:$0xff] %vm77, %v76
    // Predicated region
    $region22: #{tpu_custom_call.1} parent=1 // pred_check
      _
    $region23: #{tpu_custom_call.1} parent=1 // pred_check_branch
      %80 = sbr.rel (0) target = $region25
    $region24: #{tpu_custom_call.1} parent=1 // pred_region
      %s82 = ssub.s32 128, 128
      %83 = vsyncadd [#allocation5], %s82
      %s85 = sshll.u32 [#allocation6], 4
      %s86 = int_to_ptr.vmem [resolvable:$true] %s85
      %88 = dma.vmem_to_hbm [thread:$0]  %s86, 128, %s4, [#allocation5]
    $region25: #{tpu_custom_call.1} parent=1 // pred_fallthru
      _
    // Predicated region
    $region26: #{tpu_custom_call.1} parent=1 // pred_check
      _
    $region27: #{tpu_custom_call.1} parent=1 // pred_check_branch
      %90 = sbr.rel (0) target = $region29
    $region28: #{tpu_custom_call.1} parent=1 // pred_region
      _
    $region29: #{tpu_custom_call.1} parent=1 // pred_fallthru
      _
    // Predicated region
    $region30: #{tpu_custom_call.1} parent=1 // pred_check
      _
    $region31: #{tpu_custom_call.1} parent=1 // pred_check_branch
      %92 = sbr.rel (0) target = $region33
    $region32: #{tpu_custom_call.1} parent=1 // pred_region
      %93 = dma.done [#allocation5], 128
    $region33: #{tpu_custom_call.1} parent=1 // pred_fallthru
      _
    // Predicated region
    $region34: #{tpu_custom_call.1} parent=1 // pred_check
      _
    $region35: #{tpu_custom_call.1} parent=1 // pred_check_branch
      %95 = sbr.rel (0) target = $region37
    $region36: #{tpu_custom_call.1} parent=1 // pred_region
      _
    $region37: #{tpu_custom_call.1} parent=1 // pred_fallthru
      _
    %96 = vsyncpa [#allocation4], 1
    %97 = vsyncpa [#allocation5], 1

</llo_original>
